<compile_context>
chip_gen: v5e
topology: v5e:2x2
jax: 0.10.0
libtpu: 0.0.40
codegen_flags: <defaults>
</compile_context>

<pallas_src>
import functools

import jax
import jax.numpy as jnp
from jax.experimental import pallas as pl
from jax.experimental.pallas import tpu as pltpu


def _make_kernel(W, D, O, chunk_m, n_chunks):
    """Kernel over one (tile_m*W, D) x-block; loops over chunks of chunk_m rows."""
    rows = chunk_m * W  # matmul rows per chunk

    def kernel(x_ref, wt_ref, b_ref, o_ref):
        # x_ref : (tile_m*W, D)  flattened (m, word) rows for this tile
        # wt_ref: (D, O)         linear weight (in, out), resident across the grid
        # b_ref : (1, O)         linear bias, resident across the grid
        # o_ref : (tile_m, O)    max-pooled output tile
        wt = wt_ref[...]
        b = b_ref[...].astype(jnp.float32)

        @pl.loop(0, n_chunks)
        def _chunk(c):
            xr0 = pl.multiple_of(c * rows, rows)
            x = x_ref[pl.ds(xr0, rows), :]                              # (chunk*W, D)
            y = jnp.dot(x, wt, preferred_element_type=jnp.float32)      # (chunk*W, O)
            # Fold the word axis immediately; bias added once, after the max.
            pooled = jnp.max(y.reshape(chunk_m, W, O), axis=1) + b      # (chunk, O)
            or0 = pl.multiple_of(c * chunk_m, chunk_m)
            o_ref[pl.ds(or0, chunk_m), :] = pooled.astype(o_ref.dtype)

    return kernel


@functools.partial(jax.jit, static_argnames=("tile_m", "compute_dtype"))
def pooling_layer_forward(inputs, weight, bias, *, tile_m=1024, compute_dtype=None):
    """Forward pass of `pooling_layer`.

    inputs : (B, S, W, D)  activations
    weight : (O, D)        torch nn.Linear weight convention
    bias   : (O,)
    returns: (B, S, O)
    """
    B, S, Wn, D = inputs.shape
    O, D2 = weight.shape
    assert D2 == D
    M = B * S
    out_dtype = inputs.dtype

    # Free row-major reinterpretations only -- no extra HBM passes.
    x = inputs.reshape(M * Wn, D)
    wt = weight.T                                   # (D, O)
    if compute_dtype is not None:                   # e.g. jnp.bfloat16: halves HBM traffic
        x = x.astype(compute_dtype)
        wt = wt.astype(compute_dtype)
    b = bias.reshape(1, O).astype(jnp.float32)

    itemsize = jnp.dtype(x.dtype).itemsize
    # VMEM footprint of one m-row of the x block (last dim pads to 128 lanes).
    padded_row_bytes = Wn * (pl.cdiv(D, 128) * 128) * itemsize
    # Keep the double-buffered x block <= ~8 MiB so total VMEM stays far below the
    # default scoped limit on every generation (v7x has only 64 MiB physical).
    max_tile = max(8, ((8 * 1024 * 1024) // (2 * padded_row_bytes)) // 8 * 8)
    tile_m = min(tile_m, max_tile)

    # Inner chunk: ~512 matmul rows per chunk keeps the (chunk*W, O) intermediate
    # small while aligning the matmul M dim to the MXU height.
    chunk_m = max(8, (512 // Wn) // 8 * 8)
    chunk_m = min(chunk_m, tile_m)
    if M <= chunk_m:
        tile_m = chunk_m = M                         # single block / single chunk
    else:
        tile_m = max(chunk_m, (min(tile_m, M) // chunk_m) * chunk_m)
    n_chunks = tile_m // chunk_m
    grid_m = pl.cdiv(M, tile_m)                      # ragged last block is masked by Pallas

    cost = pl.CostEstimate(
        flops=2 * M * Wn * D * O,
        transcendentals=0,
        bytes_accessed=int(x.size) * itemsize
        + int(wt.size) * itemsize
        + int(b.size) * 4
        + M * O * jnp.dtype(out_dtype).itemsize,
    )

    out = pl.pallas_call(
        _make_kernel(Wn, D, O, chunk_m, n_chunks),
        out_shape=jax.ShapeDtypeStruct((M, O), out_dtype),
        grid_spec=pltpu.PrefetchScalarGridSpec(
            num_scalar_prefetch=0,
            grid=(grid_m,),
            in_specs=[
                pl.BlockSpec((tile_m * Wn, D), lambda i: (i, 0)),   # streamed activations
                pl.BlockSpec((D, O), lambda i: (0, 0)),             # resident weight
                pl.BlockSpec((1, O), lambda i: (0, 0)),             # resident bias
            ],
            out_specs=pl.BlockSpec((tile_m, O), lambda i: (i, 0)),
        ),
        compiler_params=pltpu.CompilerParams(
            dimension_semantics=("parallel",)),                     # v7x dual-TC splits grid
        cost_estimate=cost,
    )(x, wt, b)

    return out.reshape(B, S, O)


def _reference(inputs, weight, bias):
    y = jnp.einsum("bswd,od->bswo", inputs, weight,
                   precision=jax.lax.Precision.HIGHEST) + bias
    return jnp.max(y, axis=2)


if __name__ == "__main__":
    key = jax.random.PRNGKey(0)
    k_x, k_w, k_b, k_x2 = jax.random.split(key, 4)

    # Small shapes consistent with the module's forward.
    B, S, W, D, O = 2, 8, 8, 32, 16
    inputs = jax.random.normal(k_x, (B, S, W, D), dtype=jnp.float32)
    weight = jax.random.normal(k_w, (O, D), dtype=jnp.float32) * 0.1
    bias = jax.random.normal(k_b, (O,), dtype=jnp.float32) * 0.1

    out = pooling_layer_forward(inputs, weight, bias)
    out = jax.block_until_ready(out)
    ref = _reference(inputs, weight, bias)
    assert out.shape == (B, S, O), out.shape
    assert jnp.allclose(out, ref, atol=1e-4, rtol=1e-4), float(
        jnp.max(jnp.abs(out - ref)))

    # Second shape exercising multiple grid steps, the in-kernel chunk loop and
    # the ragged (M % tile_m != 0) boundary block.
    B2, S2 = 3, 1000
    inputs2 = jax.random.normal(k_x2, (B2, S2, W, D), dtype=jnp.float32)
    out2 = jax.block_until_ready(pooling_layer_forward(inputs2, weight, bias))
    ref2 = _reference(inputs2, weight, bias)
    assert out2.shape == (B2, S2, O), out2.shape
    assert jnp.allclose(out2, ref2, atol=1e-4, rtol=1e-4), float(
        jnp.max(jnp.abs(out2 - ref2)))

    print("KERNEL_OK")
</pallas_src>

<mosaic_0001>
module attributes {stable_mosaic.version = 11 : i64} {
  func.func @kernel(%arg0: i32, %arg1: memref<128x32xf32, #tpu.memory_space<vmem>>, %arg2: memref<32x16xf32, #tpu.memory_space<vmem>>, %arg3: memref<1x16xf32, #tpu.memory_space<vmem>>, %arg4: memref<16x16xf32, #tpu.memory_space<vmem>>) attributes {dimension_semantics = [#tpu.dimension_semantics<parallel>], iteration_bounds = array<i64: 1>, scalar_prefetch = 0 : i64, scratch_operands = 0 : i64, tpu.core_type = #tpu.core_type<tc>, window_params = [{transform_indices = @transform_0, window_bounds = array<i64: 128, 32>}, {pipeline_mode = #tpu.pipeline_mode<synchronous>, transform_indices = @transform_1, window_bounds = array<i64: 32, 16>}, {pipeline_mode = #tpu.pipeline_mode<synchronous>, transform_indices = @transform_2, window_bounds = array<i64: 1, 16>}, {transform_indices = @transform_3, window_bounds = array<i64: 16, 16>}]} {
    %c0 = arith.constant 0 : index
    %c0_0 = arith.constant 0 : index
    %0 = vector.load %arg2[%c0, %c0_0] : memref<32x16xf32, #tpu.memory_space<vmem>>, vector<32x16xf32>
    %c0_1 = arith.constant 0 : index
    %c0_2 = arith.constant 0 : index
    %1 = vector.load %arg3[%c0_1, %c0_2] : memref<1x16xf32, #tpu.memory_space<vmem>>, vector<1x16xf32>
    %c0_i32 = arith.constant 0 : i32
    %c1_i32 = arith.constant 1 : i32
    %2 = arith.muli %c0_i32, %c1_i32 : i32
    %c0_i32_3 = arith.constant 0 : i32
    %3 = arith.addi %c0_i32_3, %2 : i32
    %c128_i32 = arith.constant 128 : i32
    %4 = arith.muli %3, %c128_i32 : i32
    %5 = tpu.assume_multiple %4, 128 : i32
    %6 = arith.index_cast %5 : i32 to index
    %c0_4 = arith.constant 0 : index
    %7 = vector.load %arg1[%6, %c0_4] : memref<128x32xf32, #tpu.memory_space<vmem>>, vector<128x32xf32>
    %cst = arith.constant dense<0.000000e+00> : vector<128x16xf32>
    %8 = tpu.matmul %7, %0, %cst {dimension_numbers = #tpu.dot_dimension_numbers<[1], [0], [0], [1], [0, 0, 1, 1], [], []>} : vector<128x32xf32>, vector<32x16xf32>, vector<128x16xf32> -> vector<128x16xf32>
    %9 = vector.shape_cast %8 : vector<128x16xf32> to vector<16x8x16xf32>
    %cst_5 = arith.constant dense<0xFF800000> : vector<16x16xf32>
    %10 = vector.multi_reduction <maximumf>, %9, %cst_5 [1] : vector<16x8x16xf32> to vector<16x16xf32>
    %11 = vector.broadcast %1 : vector<1x16xf32> to vector<16x16xf32>
    %12 = arith.addf %10, %11 : vector<16x16xf32>
    %c16_i32 = arith.constant 16 : i32
    %13 = arith.muli %3, %c16_i32 : i32
    %14 = tpu.assume_multiple %13, 16 : i32
    %15 = arith.index_cast %14 : i32 to index
    %c0_6 = arith.constant 0 : index
    %16 = vector.load %arg4[%15, %c0_6] : memref<16x16xf32, #tpu.memory_space<vmem>>, vector<16x16xf32>
    tpu.vector_store %arg4[%15, %c0_6], %12 {strides = array<i32>} : memref<16x16xf32, #tpu.memory_space<vmem>>, vector<16x16xf32>,
    %c1_i32_7 = arith.constant 1 : i32
    return
  }
  func.func @transform_0(%arg0: i32) -> (i32, i32) {
    %c0_i32 = arith.constant 0 : i32
    %c0_i32_0 = arith.constant 0 : i32
    return %arg0, %c0_i32 : i32, i32
  }
  func.func @transform_1(%arg0: i32) -> (i32, i32) {
    %c0_i32 = arith.constant 0 : i32
    %c0_i32_0 = arith.constant 0 : i32
    %c0_i32_1 = arith.constant 0 : i32
    return %c0_i32, %c0_i32_0 : i32, i32
  }
  func.func @transform_2(%arg0: i32) -> (i32, i32) {
    %c0_i32 = arith.constant 0 : i32
    %c0_i32_0 = arith.constant 0 : i32
    %c0_i32_1 = arith.constant 0 : i32
    return %c0_i32, %c0_i32_0 : i32, i32
  }
  func.func @transform_3(%arg0: i32) -> (i32, i32) {
    %c0_i32 = arith.constant 0 : i32
    %c0_i32_0 = arith.constant 0 : i32
    return %arg0, %c0_i32 : i32, i32
  }
}

</mosaic_0001>

<llo_original>
// kernel: pooling_layer_forward.1
$region0: #{pooling_layer_forward.1}
  #allocation0 [shape = 'u32[]', space=smem, size = 0x4, offset = 0x4, fixed_abs, tag = 'smem constant byte address 0x4 - core index']
  #allocation1 [shape = 'u32[72,128]{1,0:T(1,128)}', space=vmem, size = 0x9000, scoped, tag = 'internal scratch']
  %s0 = inlined_call_operand.hbm [shape: f32[128,32], index: 0, kind: input, shape index: {}]
  %s1 = inlined_call_operand.vmem [shape: f32[32,16], index: 1, kind: input, shape index: {}]
  %s2 = inlined_call_operand.vmem [shape: f32[1,16], index: 2, kind: input, shape index: {}]
  %s3 = inlined_call_operand.hbm [shape: f32[16,16], index: 3, kind: output, shape index: {}]
  %s4 = sld [smem:[#allocation0]]
  $region26: #{pooling_layer_forward.1} parent=0
    _
  %s6 = ssub.s32 1, %s4
  %s7 = scalar_select 0, %s6, %s4
  $region1: #{pooling_layer_forward.1} parent=0
    #allocation2 [shape = 'u8[65536]{0}', space=vmem, size = 0x10000, scoped, tag = 'input window, operand 0, single buffered']
    #allocation3 [shape = 's32[1]{0}', space=sflag, size = 0x4, scoped, tag = 'scoped memory for pooling_layer_forward.1']
    #allocation4 [shape = 's32[1]{0}', space=sflag, size = 0x4, scoped, tag = 'scoped memory for pooling_layer_forward.1']
    #allocation5 [shape = 'u8[8192]{0}', space=vmem, size = 0x2000, scoped, tag = 'output window, operand 0, single buffered']
    %8 = vsyncpa [#allocation3], 0
    %9 = vsyncpa [#allocation4], 0
    // Predicated region
    $region2: #{pooling_layer_forward.1} parent=1 // pred_check
      _
    $region3: #{pooling_layer_forward.1} parent=1 // pred_check_branch
      %11 = sbr.rel (0) target = $region5
    $region4: #{pooling_layer_forward.1} parent=1 // pred_region
      %13 = vsyncadd [#allocation3], 0
      %s14 = sshll.u32 %s0, 4
      %s15 = int_to_ptr.hbm [resolvable:$true] %s14
      %s16 = sshll.u32 [#allocation2], 4
      %s17 = int_to_ptr.vmem [resolvable:$true] %s16
      %22 = dma.hbm_to_vmem [thread:$0]  %s15, 2048, %s17, [#allocation3], 128, 128, 8
    $region5: #{pooling_layer_forward.1} parent=1 // pred_fallthru
      _
    // Predicated region
    $region6: #{pooling_layer_forward.1} parent=1 // pred_check
      _
    $region7: #{pooling_layer_forward.1} parent=1 // pred_check_branch
      %24 = sbr.rel (0) target = $region9
    $region8: #{pooling_layer_forward.1} parent=1 // pred_region
      _
    $region9: #{pooling_layer_forward.1} parent=1 // pred_fallthru
      _
    // Predicated region
    $region10: #{pooling_layer_forward.1} parent=1 // pred_check
      _
    $region11: #{pooling_layer_forward.1} parent=1 // pred_check_branch
      %26 = sbr.rel (0) target = $region13
    $region12: #{pooling_layer_forward.1} parent=1 // pred_region
      _
    $region13: #{pooling_layer_forward.1} parent=1 // pred_fallthru
      _
    // Predicated region
    $region14: #{pooling_layer_forward.1} parent=1 // pred_check
      _
    $region15: #{pooling_layer_forward.1} parent=1 // pred_check_branch
      %28 = sbr.rel (0) target = $region17
    $region16: #{pooling_layer_forward.1} parent=1 // pred_region
      %30 = dma.done [#allocation3], 2048
    $region17: #{pooling_layer_forward.1} parent=1 // pred_fallthru
      _
    %v31 = vld [vmem:[%s1] sm:$0xff]
    %v32 = vld [vmem:[%s1 + $0x8] sm:$0xff]
    %v33 = vld [vmem:[%s1 + $0x10] sm:$0xff]
    %v34 = vld [vmem:[%s1 + $0x18] sm:$0xff]
    %v35 = vld [vmem:[%s2] sm:$0x1]
    %v36 = vld [vmem:[#allocation2] sm:$0xff]
    %v37 = vld [vmem:[#allocation2 + $0x8] sm:$0xff]
    %v38 = vld [vmem:[#allocation2 + $0x10] sm:$0xff]
    %v39 = vld [vmem:[#allocation2 + $0x18] sm:$0xff]
    %v40 = vld [vmem:[#allocation2 + $0x20] sm:$0xff]
    %v41 = vld [vmem:[#allocation2 + $0x28] sm:$0xff]
    %v42 = vld [vmem:[#allocation2 + $0x30] sm:$0xff]
    %v43 = vld [vmem:[#allocation2 + $0x38] sm:$0xff]
    %v44 = vld [vmem:[#allocation2 + $0x40] sm:$0xff]
    %v45 = vld [vmem:[#allocation2 + $0x48] sm:$0xff]
    %v46 = vld [vmem:[#allocation2 + $0x50] sm:$0xff]
    %v47 = vld [vmem:[#allocation2 + $0x58] sm:$0xff]
    %v48 = vld [vmem:[#allocation2 + $0x60] sm:$0xff]
    %v49 = vld [vmem:[#allocation2 + $0x68] sm:$0xff]
    %v50 = vld [vmem:[#allocation2 + $0x70] sm:$0xff]
    %v51 = vld [vmem:[#allocation2 + $0x78] sm:$0xff]
    %vm52 = vcmask 261120
    %v54 = vsel %vm52, %v36, 0
    %v57 = vsel %vm52, %v37, 0
    %v60 = vsel %vm52, %v38, 0
    %v63 = vsel %vm52, %v39, 0
    %v66 = vsel %vm52, %v40, 0
    %v69 = vsel %vm52, %v41, 0
    %v72 = vsel %vm52, %v42, 0
    %v75 = vsel %vm52, %v43, 0
    %v78 = vsel %vm52, %v44, 0
    %v81 = vsel %vm52, %v45, 0
    %v84 = vsel %vm52, %v46, 0
    %v87 = vsel %vm52, %v47, 0
    %v90 = vsel %vm52, %v48, 0
    %v93 = vsel %vm52, %v49, 0
    %v96 = vsel %vm52, %v50, 0
    %v99 = vsel %vm52, %v51, 0
    %101 = vmatpush.msra.mxu0 0.0
    %102 = vmatpush.msra.mxu0 0.0
    %103 = vmatpush.msra.mxu0 0.0
    %104 = vmatpush.msra.mxu0 0.0
    %105 = vmatpush.msra.mxu0 0.0
    %106 = vmatpush.msra.mxu0 0.0
    %107 = vmatpush.msra.mxu0 0.0
    %108 = vmatpush.msra.mxu0 0.0
    %109 = vmatpush.msra.mxu0 0.0
    %110 = vmatpush.msra.mxu0 0.0
    %111 = vmatpush.msra.mxu0 0.0
    %112 = vmatpush.msra.mxu0 0.0
    %113 = vmatpush.msra.mxu0 %v34
    %114 = vmatpush.msra.mxu0 %v33
    %115 = vmatpush.msra.mxu0 %v32
    %116 = vmatpush.msra.mxu0 %v31
    %117 = vmatmul.f32.gmra.mxu0 %v54
    %v118 = vpop.f32.mrf.mxu0
    %v119 = vadd.f32 0.0, %v118
    %120 = vmatmul.f32.gmra.mxu0 %v57
    %v121 = vpop.f32.mrf.mxu0
    %v122 = vadd.f32 0.0, %v121
    %123 = vmatmul.f32.gmra.mxu0 %v60
    %v124 = vpop.f32.mrf.mxu0
    %v125 = vadd.f32 0.0, %v124
    %126 = vmatmul.f32.gmra.mxu0 %v63
    %v127 = vpop.f32.mrf.mxu0
    %v128 = vadd.f32 0.0, %v127
    %129 = vmatmul.f32.gmra.mxu0 %v66
    %v130 = vpop.f32.mrf.mxu0
    %v131 = vadd.f32 0.0, %v130
    %132 = vmatmul.f32.gmra.mxu0 %v69
    %v133 = vpop.f32.mrf.mxu0
    %v134 = vadd.f32 0.0, %v133
    %135 = vmatmul.f32.gmra.mxu0 %v72
    %v136 = vpop.f32.mrf.mxu0
    %v137 = vadd.f32 0.0, %v136
    %138 = vmatmul.f32.gmra.mxu0 %v75
    %v139 = vpop.f32.mrf.mxu0
    %v140 = vadd.f32 0.0, %v139
    %141 = vmatmul.f32.gmra.mxu0 %v78
    %v142 = vpop.f32.mrf.mxu0
    %v143 = vadd.f32 0.0, %v142
    %144 = vmatmul.f32.gmra.mxu0 %v81
    %v145 = vpop.f32.mrf.mxu0
    %v146 = vadd.f32 0.0, %v145
    %147 = vmatmul.f32.gmra.mxu0 %v84
    %v148 = vpop.f32.mrf.mxu0
    %v149 = vadd.f32 0.0, %v148
    %150 = vmatmul.f32.gmra.mxu0 %v87
    %v151 = vpop.f32.mrf.mxu0
    %v152 = vadd.f32 0.0, %v151
    %153 = vmatmul.f32.gmra.mxu0 %v90
    %v154 = vpop.f32.mrf.mxu0
    %v155 = vadd.f32 0.0, %v154
    %156 = vmatmul.f32.gmra.mxu0 %v93
    %v157 = vpop.f32.mrf.mxu0
    %v158 = vadd.f32 0.0, %v157
    %159 = vmatmul.f32.gmra.mxu0 %v96
    %v160 = vpop.f32.mrf.mxu0
    %v161 = vadd.f32 0.0, %v160
    %162 = vmatmul.f32.gmra.mxu0 %v99
    %v163 = vpop.f32.mrf.mxu0
    %v164 = vadd.f32 0.0, %v163
    %165 = vdwg.mxu0
    %vm166 = vcmask 130048
    %v167 = vsel %vm166, %v119, -inf
    %v168 = vrot.slane %v167, 4
    %v169 = vmax.f32 %v167, %v168
    %v170 = vrot.slane %v169, 2
    %v171 = vmax.f32 %v169, %v170
    %v172 = vrot.slane %v171, 1
    %v173 = vmax.f32 %v171, %v172
    %v174 = vsel %vm166, %v122, -inf
    %v175 = vrot.slane %v174, 4
    %v176 = vmax.f32 %v174, %v175
    %v177 = vrot.slane %v176, 2
    %v178 = vmax.f32 %v176, %v177
    %v179 = vrot.slane %v178, 1
    %v180 = vmax.f32 %v178, %v179
    %v181 = vsel %vm166, %v125, -inf
    %v182 = vrot.slane %v181, 4
    %v183 = vmax.f32 %v181, %v182
    %v184 = vrot.slane %v183, 2
    %v185 = vmax.f32 %v183, %v184
    %v186 = vrot.slane %v185, 1
    %v187 = vmax.f32 %v185, %v186
    %v188 = vsel %vm166, %v128, -inf
    %v189 = vrot.slane %v188, 4
    %v190 = vmax.f32 %v188, %v189
    %v191 = vrot.slane %v190, 2
    %v192 = vmax.f32 %v190, %v191
    %v193 = vrot.slane %v192, 1
    %v194 = vmax.f32 %v192, %v193
    %v195 = vsel %vm166, %v131, -inf
    %v196 = vrot.slane %v195, 4
    %v197 = vmax.f32 %v195, %v196
    %v198 = vrot.slane %v197, 2
    %v199 = vmax.f32 %v197, %v198
    %v200 = vrot.slane %v199, 1
    %v201 = vmax.f32 %v199, %v200
    %v202 = vsel %vm166, %v134, -inf
    %v203 = vrot.slane %v202, 4
    %v204 = vmax.f32 %v202, %v203
    %v205 = vrot.slane %v204, 2
    %v206 = vmax.f32 %v204, %v205
    %v207 = vrot.slane %v206, 1
    %v208 = vmax.f32 %v206, %v207
    %v209 = vsel %vm166, %v137, -inf
    %v210 = vrot.slane %v209, 4
    %v211 = vmax.f32 %v209, %v210
    %v212 = vrot.slane %v211, 2
    %v213 = vmax.f32 %v211, %v212
    %v214 = vrot.slane %v213, 1
    %v215 = vmax.f32 %v213, %v214
    %v216 = vsel %vm166, %v140, -inf
    %v217 = vrot.slane %v216, 4
    %v218 = vmax.f32 %v216, %v217
    %v219 = vrot.slane %v218, 2
    %v220 = vmax.f32 %v218, %v219
    %v221 = vrot.slane %v220, 1
    %v222 = vmax.f32 %v220, %v221
    %v223 = vsel %vm166, %v143, -inf
    %v224 = vrot.slane %v223, 4
    %v225 = vmax.f32 %v223, %v224
    %v226 = vrot.slane %v225, 2
    %v227 = vmax.f32 %v225, %v226
    %v228 = vrot.slane %v227, 1
    %v229 = vmax.f32 %v227, %v228
    %v230 = vsel %vm166, %v146, -inf
    %v231 = vrot.slane %v230, 4
    %v232 = vmax.f32 %v230, %v231
    %v233 = vrot.slane %v232, 2
    %v234 = vmax.f32 %v232, %v233
    %v235 = vrot.slane %v234, 1
    %v236 = vmax.f32 %v234, %v235
    %v237 = vsel %vm166, %v149, -inf
    %v238 = vrot.slane %v237, 4
    %v239 = vmax.f32 %v237, %v238
    %v240 = vrot.slane %v239, 2
    %v241 = vmax.f32 %v239, %v240
    %v242 = vrot.slane %v241, 1
    %v243 = vmax.f32 %v241, %v242
    %v244 = vsel %vm166, %v152, -inf
    %v245 = vrot.slane %v244, 4
    %v246 = vmax.f32 %v244, %v245
    %v247 = vrot.slane %v246, 2
    %v248 = vmax.f32 %v246, %v247
    %v249 = vrot.slane %v248, 1
    %v250 = vmax.f32 %v248, %v249
    %v251 = vsel %vm166, %v155, -inf
    %v252 = vrot.slane %v251, 4
    %v253 = vmax.f32 %v251, %v252
    %v254 = vrot.slane %v253, 2
    %v255 = vmax.f32 %v253, %v254
    %v256 = vrot.slane %v255, 1
    %v257 = vmax.f32 %v255, %v256
    %v258 = vsel %vm166, %v158, -inf
    %v259 = vrot.slane %v258, 4
    %v260 = vmax.f32 %v258, %v259
    %v261 = vrot.slane %v260, 2
    %v262 = vmax.f32 %v260, %v261
    %v263 = vrot.slane %v262, 1
    %v264 = vmax.f32 %v262, %v263
    %v265 = vsel %vm166, %v161, -inf
    %v266 = vrot.slane %v265, 4
    %v267 = vmax.f32 %v265, %v266
    %v268 = vrot.slane %v267, 2
    %v269 = vmax.f32 %v267, %v268
    %v270 = vrot.slane %v269, 1
    %v271 = vmax.f32 %v269, %v270
    %v272 = vsel %vm166, %v164, -inf
    %v273 = vrot.slane %v272, 4
    %v274 = vmax.f32 %v272, %v273
    %v275 = vrot.slane %v274, 2
    %v276 = vmax.f32 %v274, %v275
    %v277 = vrot.slane %v276, 1
    %v278 = vmax.f32 %v276, %v277
    %v280 = vperm.slane %v35, 0
    %v282 = vadd.f32 %v173, %v280
    %v283 = vadd.f32 %v180, %v280
    %v284 = vadd.f32 %v187, %v280
    %v285 = vadd.f32 %v194, %v280
    %v286 = vadd.f32 %v201, %v280
    %v287 = vadd.f32 %v208, %v280
    %v288 = vadd.f32 %v215, %v280
    %v289 = vadd.f32 %v222, %v280
    %v290 = vadd.f32 %v229, %v280
    %v291 = vadd.f32 %v236, %v280
    %v292 = vadd.f32 %v243, %v280
    %v293 = vadd.f32 %v250, %v280
    %v294 = vadd.f32 %v257, %v280
    %v295 = vadd.f32 %v264, %v280
    %v296 = vadd.f32 %v271, %v280
    %v297 = vadd.f32 %v278, %v280
    %v314 = vrot.slane %v283, 7
    %vm315 = vcmask 1041409
    %v316 = vsel %vm315, %v314, %v282
    %v317 = vrot.slane %v284, 6
    %vm318 = vcmask 1042434
    %v319 = vsel %vm318, %v317, %v316
    %v320 = vrot.slane %v285, 5
    %vm321 = vcmask 1043459
    %v322 = vsel %vm321, %v320, %v319
    %v323 = vrot.slane %v286, 4
    %vm324 = vcmask 1044484
    %v325 = vsel %vm324, %v323, %v322
    %v326 = vrot.slane %v287, 3
    %vm327 = vcmask 1045509
    %v328 = vsel %vm327, %v326, %v325
    %v329 = vrot.slane %v288, 2
    %vm330 = vcmask 1046534
    %v331 = vsel %vm330, %v329, %v328
    %v332 = vrot.slane %v289, 1
    %vm333 = vcmask 1047559
    %v334 = vsel %vm333, %v332, %v331
    %v335 = vrot.slane %v291, 7
    %v336 = vsel %vm315, %v335, %v290
    %v337 = vrot.slane %v292, 6
    %v338 = vsel %vm318, %v337, %v336
    %v339 = vrot.slane %v293, 5
    %v340 = vsel %vm321, %v339, %v338
    %v341 = vrot.slane %v294, 4
    %v342 = vsel %vm324, %v341, %v340
    %v343 = vrot.slane %v295, 3
    %v344 = vsel %vm327, %v343, %v342
    %v345 = vrot.slane %v296, 2
    %v346 = vsel %vm330, %v345, %v344
    %v347 = vrot.slane %v297, 1
    %v348 = vsel %vm333, %v347, %v346
    %351 = vst.msk [vmem:[#allocation5] sm:$0xff] %vm166, %v334
    %352 = vst.msk [vmem:[#allocation5 + $0x8] sm:$0xff] %vm166, %v348
    // Predicated region
    $region18: #{pooling_layer_forward.1} parent=1 // pred_check
      _
    $region19: #{pooling_layer_forward.1} parent=1 // pred_check_branch
      %354 = sbr.rel (0) target = $region21
    $region20: #{pooling_layer_forward.1} parent=1 // pred_region
      %356 = vsyncadd [#allocation4], 0
      %s357 = sshll.u32 [#allocation5], 4
      %s358 = int_to_ptr.vmem [resolvable:$true] %s357
      %s359 = sshll.u32 %s3, 4
      %s360 = int_to_ptr.hbm [resolvable:$true] %s359
      %365 = dma.vmem_to_hbm [thread:$0]  %s358, 256, %s360, [#allocation4], 128, 128, 8
    $region21: #{pooling_layer_forward.1} parent=1 // pred_fallthru
      _
    // Predicated region
    $region22: #{pooling_layer_forward.1} parent=1 // pred_check
      _
    $region23: #{pooling_layer_forward.1} parent=1 // pred_check_branch
      %367 = sbr.rel (0) target = $region25
    $region24: #{pooling_layer_forward.1} parent=1 // pred_region
      %369 = dma.done [#allocation4], 256
    $region25: #{pooling_layer_forward.1} parent=1 // pred_fallthru
      _
    %370 = vsyncpa [#allocation3], 1
    %371 = vsyncpa [#allocation4], 1

</llo_original>
